<compile_context>
chip_gen: v7x
topology: tpu7x:2x2x1
jax: 0.10.0
libtpu: 0.0.40
codegen_flags: <defaults>
</compile_context>

<pallas_src>
import functools

import jax
import jax.numpy as jnp
from jax.experimental import pallas as pl
from jax.experimental.pallas import tpu as pltpu

EPS = 1e-5                    # torch.nn.functional.layer_norm default
_LANES = 128
_MIB = 1024 * 1024
_ROW_TILE_CAP = 8192          # keeps per-step DMA latency and compile size reasonable


def _vmem_budgets():
    """(vmem_limit_bytes, tile_budget_bytes) derived from the chip's physical VMEM."""
    try:
        cap = getattr(pltpu.get_tpu_info(), "vmem_capacity_bytes", None)
    except Exception:
        cap = None
    if cap is None:
        cap = 64 * _MIB                        # conservative fallback (v7x-sized VMEM)
    if cap >= 100 * _MIB:                      # v5e / v6e: 128 MiB physical VMEM
        return 64 * _MIB, 44 * _MIB
    return 32 * _MIB, 22 * _MIB                # v7x: 64 MiB physical per TensorCore


def _sublane_pack(itemsize):
    """Rows per packed sublane group: 8 for f32, 16 for bf16, 32 for int8/fp8."""
    return 8 * max(1, 4 // itemsize)


def _pick_block_rows(rows, width, itemsize, budget_bytes, f32_temps):
    """Largest row tile (multiple of the sublane pack) fitting the VMEM budget."""
    sub = _sublane_pack(itemsize)
    # Per row: double-buffered in + out DMA buffers in the I/O dtype, plus roughly
    # `f32_temps` live full-tile f32 temporaries inside the kernel.
    per_row = 4 * width * itemsize + 4 * f32_temps * width
    tm = budget_bytes // per_row
    tm = max(sub, (tm // sub) * sub)
    tm = min(tm, _ROW_TILE_CAP)
    # Target >= 4 grid steps (>= 2 per TensorCore on v7x) when rows allow, so each core
    # still overlaps DMA with compute instead of running one exposed step.
    if rows >= 4 * sub:
        tm = min(tm, max(sub, ((rows // 4) // sub) * sub))
    if tm >= rows:
        return rows            # single full-extent block (legal for any size)
    return tm


def _layernorm_rows_kernel(x_ref, gamma_ref, beta_ref, o_ref):
    # x_ref: (TM, D); gamma_ref/beta_ref: (1, D) f32.  One-pass stats, math in f32.
    xf = x_ref[...].astype(jnp.float32)
    inv_d = 1.0 / x_ref.shape[-1]
    mean = jnp.sum(xf, axis=-1, keepdims=True) * inv_d
    msq = jnp.sum(xf * xf, axis=-1, keepdims=True) * inv_d
    var = jnp.maximum(msq - mean * mean, 0.0)
    inv = jax.lax.rsqrt(var + EPS)
    o_ref[...] = ((xf - mean) * inv * gamma_ref[...] + beta_ref[...]).astype(o_ref.dtype)


def _layernorm_packed_kernel(x_ref, gamma_ref, beta_ref, seg_ref, o_ref, *, inv_d):
    # x_ref: (TM, 128); each row holds 128 // D original rows side by side.
    # seg_ref: (128, 128) block-diagonal ones matrix: xf @ seg gives, at every lane,
    # the sum over that lane's D-wide segment (reduce + broadcast in one MXU pass).
    xf = x_ref[...].astype(jnp.float32)
    seg = seg_ref[...]

    def _seg_sum(v):
        # hi/lo split keeps the segment sums f32-accurate even if the MXU rounds its
        # operands to bf16 under default matmul precision; the MXU is idle here anyway.
        hi = v.astype(jnp.bfloat16).astype(jnp.float32)
        lo = v - hi
        return (jnp.dot(hi, seg, preferred_element_type=jnp.float32)
                + jnp.dot(lo, seg, preferred_element_type=jnp.float32))

    mean = _seg_sum(xf) * inv_d
    msq = _seg_sum(xf * xf) * inv_d
    var = jnp.maximum(msq - mean * mean, 0.0)
    inv = jax.lax.rsqrt(var + EPS)
    o_ref[...] = ((xf - mean) * inv * gamma_ref[...] + beta_ref[...]).astype(o_ref.dtype)


def layer_norm(x, gamma, beta):
    """x: (..., D); gamma, beta: (D,). Returns same shape/dtype as x."""
    orig_shape = x.shape
    D = int(orig_shape[-1])
    rows = 1
    for s in orig_shape[:-1]:
        rows *= int(s)
    itemsize = jnp.dtype(x.dtype).itemsize
    vmem_limit, budget = _vmem_budgets()

    gamma_f32 = gamma.astype(jnp.float32)
    beta_f32 = beta.astype(jnp.float32)

    pack = (rows > 0 and D < _LANES and _LANES % D == 0
            and rows % (_LANES // D) == 0)

    if pack:
        # Lane-packing path: fold g rows into one 128-lane row (lane-dense I/O).
        g = _LANES // D
        prow = rows // g
        x2 = x.reshape(prow, _LANES)                        # contiguous -> free reshape
        gamma2 = jnp.tile(gamma_f32, g).reshape(1, _LANES)
        beta2 = jnp.tile(beta_f32, g).reshape(1, _LANES)
        lane_seg = jnp.arange(_LANES, dtype=jnp.int32) // D
        seg_mat = (lane_seg[:, None] == lane_seg[None, :]).astype(jnp.float32)

        tm = _pick_block_rows(prow, _LANES, itemsize, budget, f32_temps=4)
        grid = (pl.cdiv(prow, tm),)   # ragged final block: reads padded, writes masked
        out = pl.pallas_call(
            functools.partial(_layernorm_packed_kernel, inv_d=1.0 / D),
            out_shape=jax.ShapeDtypeStruct((prow, _LANES), x.dtype),
            grid_spec=pltpu.PrefetchScalarGridSpec(
                num_scalar_prefetch=0,
                grid=grid,
                in_specs=[
                    pl.BlockSpec((tm, _LANES), lambda i: (i, 0)),
                    pl.BlockSpec((1, _LANES), lambda i: (0, 0)),
                    pl.BlockSpec((1, _LANES), lambda i: (0, 0)),
                    pl.BlockSpec((_LANES, _LANES), lambda i: (0, 0)),
                ],
                out_specs=pl.BlockSpec((tm, _LANES), lambda i: (i, 0)),
            ),
            compiler_params=pltpu.CompilerParams(
                dimension_semantics=("parallel",),
                vmem_limit_bytes=vmem_limit,
            ),
        )(x2, gamma2, beta2, seg_mat)
        return out.reshape(orig_shape)

    # General row-tiled path (D >= 128, or shapes the lane packer can't take).
    x2 = x.reshape(rows, D)
    gamma2 = gamma_f32.reshape(1, D)
    beta2 = beta_f32.reshape(1, D)

    tm = _pick_block_rows(rows, D, itemsize, budget, f32_temps=2)
    grid = (pl.cdiv(rows, tm),)       # ragged final block: reads padded, writes masked
    out = pl.pallas_call(
        _layernorm_rows_kernel,
        out_shape=jax.ShapeDtypeStruct((rows, D), x.dtype),
        grid_spec=pltpu.PrefetchScalarGridSpec(
            num_scalar_prefetch=0,
            grid=grid,
            in_specs=[
                pl.BlockSpec((tm, D), lambda i: (i, 0)),
                pl.BlockSpec((1, D), lambda i: (0, 0)),
                pl.BlockSpec((1, D), lambda i: (0, 0)),
            ],
            out_specs=pl.BlockSpec((tm, D), lambda i: (i, 0)),
        ),
        compiler_params=pltpu.CompilerParams(
            dimension_semantics=("parallel",),
            vmem_limit_bytes=vmem_limit,
        ),
    )(x2, gamma2, beta2)
    return out.reshape(orig_shape)


if __name__ == "__main__":
    def ref_layernorm(x, gamma, beta):
        xf = x.astype(jnp.float32)
        mean = jnp.mean(xf, axis=-1, keepdims=True)
        var = jnp.mean((xf - mean) ** 2, axis=-1, keepdims=True)
        return ((xf - mean) / jnp.sqrt(var + EPS) * gamma.astype(jnp.float32)
                + beta.astype(jnp.float32))

    key = jax.random.PRNGKey(0)

    # Case 1: packed lane-dense path (dim=32 -> 4 rows folded per 128-lane row).
    batch, seq, dim = 2, 8, 32
    x = jax.random.normal(key, (batch, seq, dim), dtype=jnp.float32)
    gamma = jnp.ones((dim,), dtype=jnp.float32)    # nn.Parameter(torch.ones(dim))
    beta = jnp.zeros((dim,), dtype=jnp.float32)    # buffer torch.zeros(dim)
    y = jax.block_until_ready(layer_norm(x, gamma, beta))
    assert jnp.allclose(y, ref_layernorm(x, gamma, beta), atol=1e-4, rtol=1e-4), \
        "mismatch vs reference (packed)"

    # Case 2: row path (rows=21 not packable), single full-extent block.
    x2 = jax.random.normal(jax.random.PRNGKey(1), (3, 7, dim), dtype=jnp.float32)
    y2 = jax.block_until_ready(layer_norm(x2, gamma, beta))
    assert jnp.allclose(y2, ref_layernorm(x2, gamma, beta), atol=1e-5, rtol=1e-5), \
        "mismatch vs reference (row path)"

    # Case 3: packed path with a ragged, multi-step grid (packed rows=33, tile=8).
    x3 = jax.random.normal(jax.random.PRNGKey(2), (4, 33, dim), dtype=jnp.float32)
    y3 = jax.block_until_ready(layer_norm(x3, gamma, beta))
    assert jnp.allclose(y3, ref_layernorm(x3, gamma, beta), atol=1e-4, rtol=1e-4), \
        "mismatch vs reference (packed, ragged)"

    # Case 4: bf16 I/O, lane-dense D=256, ragged multi-step row path (rows=69, tile=16).
    dim4 = 256
    x4 = jax.random.normal(jax.random.PRNGKey(3), (3, 23, dim4), dtype=jnp.bfloat16)
    gamma4 = jnp.ones((dim4,), dtype=jnp.bfloat16)
    beta4 = jnp.zeros((dim4,), dtype=jnp.bfloat16)
    y4 = jax.block_until_ready(layer_norm(x4, gamma4, beta4))
    assert jnp.allclose(y4.astype(jnp.float32), ref_layernorm(x4, gamma4, beta4),
                        atol=5e-2, rtol=5e-2), "mismatch vs reference (bf16)"

    print("KERNEL_OK")
</pallas_src>

<mosaic_0001>
module attributes {stable_mosaic.version = 11 : i64} {
  func.func @_layernorm_packed_kernel(%arg0: i32, %arg1: memref<4x128xf32, #tpu.memory_space<vmem>>, %arg2: memref<1x128xf32, #tpu.memory_space<vmem>>, %arg3: memref<1x128xf32, #tpu.memory_space<vmem>>, %arg4: memref<128x128xf32, #tpu.memory_space<vmem>>, %arg5: memref<4x128xf32, #tpu.memory_space<vmem>>) attributes {dimension_semantics = [#tpu.dimension_semantics<parallel>], iteration_bounds = array<i64: 1>, scalar_prefetch = 0 : i64, scratch_operands = 0 : i64, tpu.core_type = #tpu.core_type<tc>, window_params = [{transform_indices = @transform_0, window_bounds = array<i64: 4, 128>}, {pipeline_mode = #tpu.pipeline_mode<synchronous>, transform_indices = @transform_1, window_bounds = array<i64: 1, 128>}, {pipeline_mode = #tpu.pipeline_mode<synchronous>, transform_indices = @transform_2, window_bounds = array<i64: 1, 128>}, {pipeline_mode = #tpu.pipeline_mode<synchronous>, transform_indices = @transform_3, window_bounds = array<i64: 128, 128>}, {transform_indices = @transform_4, window_bounds = array<i64: 4, 128>}]} {
    %c0 = arith.constant 0 : index
    %c0_0 = arith.constant 0 : index
    %0 = vector.load %arg1[%c0, %c0_0] : memref<4x128xf32, #tpu.memory_space<vmem>>, vector<4x128xf32>
    %c0_1 = arith.constant 0 : index
    %c0_2 = arith.constant 0 : index
    %1 = vector.load %arg4[%c0_1, %c0_2] : memref<128x128xf32, #tpu.memory_space<vmem>>, vector<128x128xf32>
    %2 = arith.truncf %0 : vector<4x128xf32> to vector<4x128xbf16>
    %3 = arith.extf %2 : vector<4x128xbf16> to vector<4x128xf32>
    %4 = arith.subf %0, %3 : vector<4x128xf32>
    %cst = arith.constant dense<0.000000e+00> : vector<4x128xf32>
    %5 = tpu.matmul %3, %1, %cst {dimension_numbers = #tpu.dot_dimension_numbers<[1], [0], [0], [1], [0, 0, 1, 1], [], []>} : vector<4x128xf32>, vector<128x128xf32>, vector<4x128xf32> -> vector<4x128xf32>
    %cst_3 = arith.constant dense<0.000000e+00> : vector<4x128xf32>
    %6 = tpu.matmul %4, %1, %cst_3 {dimension_numbers = #tpu.dot_dimension_numbers<[1], [0], [0], [1], [0, 0, 1, 1], [], []>} : vector<4x128xf32>, vector<128x128xf32>, vector<4x128xf32> -> vector<4x128xf32>
    %7 = arith.addf %5, %6 : vector<4x128xf32>
    %cst_4 = arith.constant 3.125000e-02 : f32
    %8 = vector.broadcast %cst_4 : f32 to vector<4x128xf32>
    %9 = arith.mulf %7, %8 : vector<4x128xf32>
    %10 = arith.mulf %0, %0 : vector<4x128xf32>
    %11 = arith.truncf %10 : vector<4x128xf32> to vector<4x128xbf16>
    %12 = arith.extf %11 : vector<4x128xbf16> to vector<4x128xf32>
    %13 = arith.subf %10, %12 : vector<4x128xf32>
    %cst_5 = arith.constant dense<0.000000e+00> : vector<4x128xf32>
    %14 = tpu.matmul %12, %1, %cst_5 {dimension_numbers = #tpu.dot_dimension_numbers<[1], [0], [0], [1], [0, 0, 1, 1], [], []>} : vector<4x128xf32>, vector<128x128xf32>, vector<4x128xf32> -> vector<4x128xf32>
    %cst_6 = arith.constant dense<0.000000e+00> : vector<4x128xf32>
    %15 = tpu.matmul %13, %1, %cst_6 {dimension_numbers = #tpu.dot_dimension_numbers<[1], [0], [0], [1], [0, 0, 1, 1], [], []>} : vector<4x128xf32>, vector<128x128xf32>, vector<4x128xf32> -> vector<4x128xf32>
    %16 = arith.addf %14, %15 : vector<4x128xf32>
    %cst_7 = arith.constant 3.125000e-02 : f32
    %17 = vector.broadcast %cst_7 : f32 to vector<4x128xf32>
    %18 = arith.mulf %16, %17 : vector<4x128xf32>
    %19 = arith.mulf %9, %9 : vector<4x128xf32>
    %20 = arith.subf %18, %19 : vector<4x128xf32>
    %cst_8 = arith.constant 0.000000e+00 : f32
    %21 = vector.broadcast %cst_8 : f32 to vector<4x128xf32>
    %22 = arith.maximumf %20, %21 : vector<4x128xf32>
    %cst_9 = arith.constant 9.99999974E-6 : f32
    %23 = vector.broadcast %cst_9 : f32 to vector<4x128xf32>
    %24 = arith.addf %22, %23 : vector<4x128xf32>
    %25 = math.rsqrt %24 : vector<4x128xf32>
    %26 = arith.subf %0, %9 : vector<4x128xf32>
    %27 = arith.mulf %26, %25 : vector<4x128xf32>
    %c0_10 = arith.constant 0 : index
    %c0_11 = arith.constant 0 : index
    %28 = vector.load %arg2[%c0_10, %c0_11] : memref<1x128xf32, #tpu.memory_space<vmem>>, vector<1x128xf32>
    %29 = vector.broadcast %28 : vector<1x128xf32> to vector<4x128xf32>
    %30 = arith.mulf %27, %29 : vector<4x128xf32>
    %c0_12 = arith.constant 0 : index
    %c0_13 = arith.constant 0 : index
    %31 = vector.load %arg3[%c0_12, %c0_13] : memref<1x128xf32, #tpu.memory_space<vmem>>, vector<1x128xf32>
    %32 = vector.broadcast %31 : vector<1x128xf32> to vector<4x128xf32>
    %33 = arith.addf %30, %32 : vector<4x128xf32>
    %c0_14 = arith.constant 0 : index
    %c0_15 = arith.constant 0 : index
    %34 = vector.load %arg5[%c0_14, %c0_15] : memref<4x128xf32, #tpu.memory_space<vmem>>, vector<4x128xf32>
    tpu.vector_store %arg5[%c0_14, %c0_15], %33 {strides = array<i32>} : memref<4x128xf32, #tpu.memory_space<vmem>>, vector<4x128xf32>,
    return
  }
  func.func @transform_0(%arg0: i32) -> (i32, i32) {
    %c0_i32 = arith.constant 0 : i32
    %c0_i32_0 = arith.constant 0 : i32
    return %arg0, %c0_i32 : i32, i32
  }
  func.func @transform_1(%arg0: i32) -> (i32, i32) {
    %c0_i32 = arith.constant 0 : i32
    %c0_i32_0 = arith.constant 0 : i32
    %c0_i32_1 = arith.constant 0 : i32
    return %c0_i32, %c0_i32_0 : i32, i32
  }
  func.func @transform_2(%arg0: i32) -> (i32, i32) {
    %c0_i32 = arith.constant 0 : i32
    %c0_i32_0 = arith.constant 0 : i32
    %c0_i32_1 = arith.constant 0 : i32
    return %c0_i32, %c0_i32_0 : i32, i32
  }
  func.func @transform_3(%arg0: i32) -> (i32, i32) {
    %c0_i32 = arith.constant 0 : i32
    %c0_i32_0 = arith.constant 0 : i32
    %c0_i32_1 = arith.constant 0 : i32
    return %c0_i32, %c0_i32_0 : i32, i32
  }
  func.func @transform_4(%arg0: i32) -> (i32, i32) {
    %c0_i32 = arith.constant 0 : i32
    %c0_i32_0 = arith.constant 0 : i32
    return %arg0, %c0_i32 : i32, i32
  }
}

</mosaic_0001>

<llo_original>
// kernel: tpu_custom_call.1
$region0: #{tpu_custom_call.1}
  #allocation0 [shape = 'u32[]', space=smem, size = 0x4, offset = 0x4, fixed_abs, tag = 'smem constant byte address 0x4 - core index']
  #allocation1 [shape = 'u32[144,128]{1,0:T(1,128)}', space=vmem, size = 0x12000, scoped, tag = 'internal scratch']
  %s0 = inlined_call_operand.hbm [shape: f32[4,128], index: 0, kind: input, shape index: {}]
  %s1 = inlined_call_operand.vmem [shape: f32[1,128], index: 1, kind: input, shape index: {}]
  %s2 = inlined_call_operand.vmem [shape: f32[1,128], index: 2, kind: input, shape index: {}]
  %s3 = inlined_call_operand.hbm [shape: f32[128,128], index: 3, kind: input, shape index: {}]
  %s4 = inlined_call_operand.hbm [shape: f32[4,128], index: 4, kind: output, shape index: {}]
  %s5 = sld [smem:[#allocation0]]
  $region34: #{tpu_custom_call.1} parent=0
    _
  %s7 = ssub.s32 1, %s5
  %s8 = scalar_select 0, %s7, %s5
  $region1: #{tpu_custom_call.1} parent=0
    #allocation2 [shape = 'u8[2048]{0}', space=vmem, size = 0x800, scoped, tag = 'input window, operand 0, single buffered']
    #allocation3 [shape = 's32[1]{0}', space=sflag, size = 0x4, scoped, tag = 'scoped memory for tpu_custom_call.1']
    #allocation4 [shape = 's32[1]{0}', space=sflag, size = 0x4, scoped, tag = 'scoped memory for tpu_custom_call.1']
    #allocation5 [shape = 'u8[65536]{0}', space=vmem, size = 0x10000, scoped, tag = 'input window, operand 3, single buffered']
    #allocation6 [shape = 's32[1]{0}', space=sflag, size = 0x4, scoped, tag = 'scoped memory for tpu_custom_call.1']
    #allocation7 [shape = 'u8[2048]{0}', space=vmem, size = 0x800, scoped, tag = 'output window, operand 0, single buffered']
    %9 = vsyncpa [#allocation3], 0
    %10 = vsyncpa [#allocation6], 0
    %11 = vsyncpa [#allocation4], 0
    // Predicated region
    $region2: #{tpu_custom_call.1} parent=1 // pred_check
      _
    $region3: #{tpu_custom_call.1} parent=1 // pred_check_branch
      %13 = sbr.rel (0) target = $region5
    $region4: #{tpu_custom_call.1} parent=1 // pred_region
      %s15 = ssub.s32 64, 64
      %16 = vsyncadd [#allocation3], %s15
      %s18 = sshll.u32 [#allocation2], 4
      %s19 = int_to_ptr.vmem [resolvable:$true] %s18
      %21 = dma.hbm_to_vmem [thread:$0]  %s0, 64, %s19, [#allocation3]
    $region5: #{tpu_custom_call.1} parent=1 // pred_fallthru
      _
    // Predicated region
    $region6: #{tpu_custom_call.1} parent=1 // pred_check
      _
    $region7: #{tpu_custom_call.1} parent=1 // pred_check_branch
      %23 = sbr.rel (0) target = $region9
    $region8: #{tpu_custom_call.1} parent=1 // pred_region
      _
    $region9: #{tpu_custom_call.1} parent=1 // pred_fallthru
      _
    // Predicated region
    $region10: #{tpu_custom_call.1} parent=1 // pred_check
      _
    $region11: #{tpu_custom_call.1} parent=1 // pred_check_branch
      %25 = sbr.rel (0) target = $region13
    $region12: #{tpu_custom_call.1} parent=1 // pred_region
      _
    $region13: #{tpu_custom_call.1} parent=1 // pred_fallthru
      _
    // Predicated region
    $region14: #{tpu_custom_call.1} parent=1 // pred_check
      _
    $region15: #{tpu_custom_call.1} parent=1 // pred_check_branch
      %27 = sbr.rel (0) target = $region17
    $region16: #{tpu_custom_call.1} parent=1 // pred_region
      %s29 = ssub.s32 2048, 2048
      %30 = vsyncadd [#allocation6], %s29
      %s31 = sshll.u32 [#allocation5], 4
      %s32 = int_to_ptr.vmem [resolvable:$true] %s31
      %37 = dma.hbm_to_vmem [thread:$0]  %s3, 2048, %s32, [#allocation6], 128, 128, 8
    $region17: #{tpu_custom_call.1} parent=1 // pred_fallthru
      _
    // Predicated region
    $region18: #{tpu_custom_call.1} parent=1 // pred_check
      _
    $region19: #{tpu_custom_call.1} parent=1 // pred_check_branch
      %39 = sbr.rel (0) target = $region21
    $region20: #{tpu_custom_call.1} parent=1 // pred_region
      %40 = dma.done [#allocation3], 64
    $region21: #{tpu_custom_call.1} parent=1 // pred_fallthru
      _
    // Predicated region
    $region22: #{tpu_custom_call.1} parent=1 // pred_check
      _
    $region23: #{tpu_custom_call.1} parent=1 // pred_check_branch
      %42 = sbr.rel (0) target = $region25
    $region24: #{tpu_custom_call.1} parent=1 // pred_region
      %43 = dma.done [#allocation6], 2048
    $region25: #{tpu_custom_call.1} parent=1 // pred_fallthru
      _
    %v44 = vld [vmem:[#allocation2] sm:$0xf]
    %v45 = vld [vmem:[#allocation5] sm:$0xff]
    %v46 = vld [vmem:[#allocation5 + $0x8] sm:$0xff]
    %v47 = vld [vmem:[#allocation5 + $0x10] sm:$0xff]
    %v48 = vld [vmem:[#allocation5 + $0x18] sm:$0xff]
    %v49 = vld [vmem:[#allocation5 + $0x20] sm:$0xff]
    %v50 = vld [vmem:[#allocation5 + $0x28] sm:$0xff]
    %v51 = vld [vmem:[#allocation5 + $0x30] sm:$0xff]
    %v52 = vld [vmem:[#allocation5 + $0x38] sm:$0xff]
    %v53 = vld [vmem:[#allocation5 + $0x40] sm:$0xff]
    %v54 = vld [vmem:[#allocation5 + $0x48] sm:$0xff]
    %v55 = vld [vmem:[#allocation5 + $0x50] sm:$0xff]
    %v56 = vld [vmem:[#allocation5 + $0x58] sm:$0xff]
    %v57 = vld [vmem:[#allocation5 + $0x60] sm:$0xff]
    %v58 = vld [vmem:[#allocation5 + $0x68] sm:$0xff]
    %v59 = vld [vmem:[#allocation5 + $0x70] sm:$0xff]
    %v60 = vld [vmem:[#allocation5 + $0x78] sm:$0xff]
    %v61 = vpack.c.bf16 %v44, %v44
    %v62 = vunpack.c.l.bf16 %v61
    %v63 = vsub.f32 %v44, %v62
    %64 = vmatprep.subr.mxu0 0.0
    %65 = vmatpush1.msra.mxu0 %v45
    %66 = vmatprep.subr.mxu0 0.0
    %67 = vmatpush1.msra.mxu0 %v46
    %68 = vmatprep.subr.mxu0 0.0
    %69 = vmatpush1.msra.mxu0 %v47
    %70 = vmatprep.subr.mxu0 0.0
    %71 = vmatpush1.msra.mxu0 %v48
    %72 = vmatprep.subr.mxu0 0.0
    %73 = vmatpush1.msra.mxu0 %v49
    %74 = vmatprep.subr.mxu0 0.0
    %75 = vmatpush1.msra.mxu0 %v50
    %76 = vmatprep.subr.mxu0 0.0
    %77 = vmatpush1.msra.mxu0 %v51
    %78 = vmatprep.subr.mxu0 0.0
    %79 = vmatpush1.msra.mxu0 %v52
    %80 = vmatprep.subr.mxu0 0.0
    %81 = vmatpush1.msra.mxu0 %v53
    %82 = vmatprep.subr.mxu0 0.0
    %83 = vmatpush1.msra.mxu0 %v54
    %84 = vmatprep.subr.mxu0 0.0
    %85 = vmatpush1.msra.mxu0 %v55
    %86 = vmatprep.subr.mxu0 0.0
    %87 = vmatpush1.msra.mxu0 %v56
    %88 = vmatprep.subr.mxu0 0.0
    %89 = vmatpush1.msra.mxu0 %v57
    %90 = vmatprep.subr.mxu0 0.0
    %91 = vmatpush1.msra.mxu0 %v58
    %92 = vmatprep.subr.mxu0 0.0
    %93 = vmatpush1.msra.mxu0 %v59
    %94 = vmatprep.subr.mxu0 0.0
    %95 = vmatpush1.msra.mxu0 %v60
    %96 = vmatprep.subr.mxu0 0.0
    %97 = vmatpush1.msra.mxu0 0.0
    %98 = vmatprep.subr.mxu0 0.0
    %99 = vmatpush1.msra.mxu0 0.0
    %100 = vmatprep.subr.mxu0 0.0
    %101 = vmatpush1.msra.mxu0 0.0
    %102 = vmatprep.subr.mxu0 0.0
    %103 = vmatpush1.msra.mxu0 0.0
    %104 = vmatprep.subr.mxu0 0.0
    %105 = vmatpush1.msra.mxu0 0.0
    %106 = vmatprep.subr.mxu0 0.0
    %107 = vmatpush1.msra.mxu0 0.0
    %108 = vmatprep.subr.mxu0 0.0
    %109 = vmatpush1.msra.mxu0 0.0
    %110 = vmatprep.subr.mxu0 0.0
    %111 = vmatpush1.msra.mxu0 0.0
    %112 = vmatprep.subr.mxu0 0.0
    %113 = vmatpush1.msra.mxu0 0.0
    %114 = vmatprep.subr.mxu0 0.0
    %115 = vmatpush1.msra.mxu0 0.0
    %116 = vmatprep.subr.mxu0 0.0
    %117 = vmatpush1.msra.mxu0 0.0
    %118 = vmatprep.subr.mxu0 0.0
    %119 = vmatpush1.msra.mxu0 0.0
    %120 = vmatprep.subr.mxu0 0.0
    %121 = vmatpush1.msra.mxu0 0.0
    %122 = vmatprep.subr.mxu0 0.0
    %123 = vmatpush1.msra.mxu0 0.0
    %124 = vmatprep.subr.mxu0 0.0
    %125 = vmatpush1.msra.mxu0 0.0
    %126 = vmatprep.subr.mxu0 0.0
    %127 = vmatpush1.msra.mxu0 0.0
    %128 = vmatprep.mubr.f32.mxu0 0.0
    %129 = vmatmul.mubr.f32.gmra.mrb[0].mxu0 %v63
    %v130 = vpop.f32.mrb[0].mxu0
    %v131 = vadd.f32 0.0, %v130
    %v132 = vpop.f32.mrb[0].mxu0
    %133 = vdwg.mxu0
    %134 = vmatprep.subr.mxu0 0.0
    %135 = vmatpush1.msra.mxu0 %v45
    %136 = vmatprep.subr.mxu0 0.0
    %137 = vmatpush1.msra.mxu0 %v46
    %138 = vmatprep.subr.mxu0 0.0
    %139 = vmatpush1.msra.mxu0 %v47
    %140 = vmatprep.subr.mxu0 0.0
    %141 = vmatpush1.msra.mxu0 %v48
    %142 = vmatprep.subr.mxu0 0.0
    %143 = vmatpush1.msra.mxu0 %v49
    %144 = vmatprep.subr.mxu0 0.0
    %145 = vmatpush1.msra.mxu0 %v50
    %146 = vmatprep.subr.mxu0 0.0
    %147 = vmatpush1.msra.mxu0 %v51
    %148 = vmatprep.subr.mxu0 0.0
    %149 = vmatpush1.msra.mxu0 %v52
    %150 = vmatprep.subr.mxu0 0.0
    %151 = vmatpush1.msra.mxu0 %v53
    %152 = vmatprep.subr.mxu0 0.0
    %153 = vmatpush1.msra.mxu0 %v54
    %154 = vmatprep.subr.mxu0 0.0
    %155 = vmatpush1.msra.mxu0 %v55
    %156 = vmatprep.subr.mxu0 0.0
    %157 = vmatpush1.msra.mxu0 %v56
    %158 = vmatprep.subr.mxu0 0.0
    %159 = vmatpush1.msra.mxu0 %v57
    %160 = vmatprep.subr.mxu0 0.0
    %161 = vmatpush1.msra.mxu0 %v58
    %162 = vmatprep.subr.mxu0 0.0
    %163 = vmatpush1.msra.mxu0 %v59
    %164 = vmatprep.subr.mxu0 0.0
    %165 = vmatpush1.msra.mxu0 %v60
    %166 = vmatprep.subr.mxu0 0.0
    %167 = vmatpush1.msra.mxu0 0.0
    %168 = vmatprep.subr.mxu0 0.0
    %169 = vmatpush1.msra.mxu0 0.0
    %170 = vmatprep.subr.mxu0 0.0
    %171 = vmatpush1.msra.mxu0 0.0
    %172 = vmatprep.subr.mxu0 0.0
    %173 = vmatpush1.msra.mxu0 0.0
    %174 = vmatprep.subr.mxu0 0.0
    %175 = vmatpush1.msra.mxu0 0.0
    %176 = vmatprep.subr.mxu0 0.0
    %177 = vmatpush1.msra.mxu0 0.0
    %178 = vmatprep.subr.mxu0 0.0
    %179 = vmatpush1.msra.mxu0 0.0
    %180 = vmatprep.subr.mxu0 0.0
    %181 = vmatpush1.msra.mxu0 0.0
    %182 = vmatprep.subr.mxu0 0.0
    %183 = vmatpush1.msra.mxu0 0.0
    %184 = vmatprep.subr.mxu0 0.0
    %185 = vmatpush1.msra.mxu0 0.0
    %186 = vmatprep.subr.mxu0 0.0
    %187 = vmatpush1.msra.mxu0 0.0
    %188 = vmatprep.subr.mxu0 0.0
    %189 = vmatpush1.msra.mxu0 0.0
    %190 = vmatprep.subr.mxu0 0.0
    %191 = vmatpush1.msra.mxu0 0.0
    %192 = vmatprep.subr.mxu0 0.0
    %193 = vmatpush1.msra.mxu0 0.0
    %194 = vmatprep.subr.mxu0 0.0
    %195 = vmatpush1.msra.mxu0 0.0
    %196 = vmatprep.subr.mxu0 0.0
    %197 = vmatpush1.msra.mxu0 0.0
    %198 = vmatprep.mubr.f32.mxu0 0.0
    %199 = vmatmul.mubr.f32.gmra.mrb[0].mxu0 %v62
    %v200 = vpop.f32.mrb[0].mxu0
    %v201 = vadd.f32 %v131, %v200
    %v202 = vpop.f32.mrb[0].mxu0
    %203 = vdwg.mxu0
    %v204 = vmul.f32 %v201, 0.03125
    %v205 = vmul.f32 %v44, %v44
    %v206 = vpack.c.bf16 %v205, %v205
    %v207 = vunpack.c.l.bf16 %v206
    %v208 = vsub.f32 %v205, %v207
    %209 = vmatprep.subr.mxu0 0.0
    %210 = vmatpush1.msra.mxu0 %v45
    %211 = vmatprep.subr.mxu0 0.0
    %212 = vmatpush1.msra.mxu0 %v46
    %213 = vmatprep.subr.mxu0 0.0
    %214 = vmatpush1.msra.mxu0 %v47
    %215 = vmatprep.subr.mxu0 0.0
    %216 = vmatpush1.msra.mxu0 %v48
    %217 = vmatprep.subr.mxu0 0.0
    %218 = vmatpush1.msra.mxu0 %v49
    %219 = vmatprep.subr.mxu0 0.0
    %220 = vmatpush1.msra.mxu0 %v50
    %221 = vmatprep.subr.mxu0 0.0
    %222 = vmatpush1.msra.mxu0 %v51
    %223 = vmatprep.subr.mxu0 0.0
    %224 = vmatpush1.msra.mxu0 %v52
    %225 = vmatprep.subr.mxu0 0.0
    %226 = vmatpush1.msra.mxu0 %v53
    %227 = vmatprep.subr.mxu0 0.0
    %228 = vmatpush1.msra.mxu0 %v54
    %229 = vmatprep.subr.mxu0 0.0
    %230 = vmatpush1.msra.mxu0 %v55
    %231 = vmatprep.subr.mxu0 0.0
    %232 = vmatpush1.msra.mxu0 %v56
    %233 = vmatprep.subr.mxu0 0.0
    %234 = vmatpush1.msra.mxu0 %v57
    %235 = vmatprep.subr.mxu0 0.0
    %236 = vmatpush1.msra.mxu0 %v58
    %237 = vmatprep.subr.mxu0 0.0
    %238 = vmatpush1.msra.mxu0 %v59
    %239 = vmatprep.subr.mxu0 0.0
    %240 = vmatpush1.msra.mxu0 %v60
    %241 = vmatprep.subr.mxu0 0.0
    %242 = vmatpush1.msra.mxu0 0.0
    %243 = vmatprep.subr.mxu0 0.0
    %244 = vmatpush1.msra.mxu0 0.0
    %245 = vmatprep.subr.mxu0 0.0
    %246 = vmatpush1.msra.mxu0 0.0
    %247 = vmatprep.subr.mxu0 0.0
    %248 = vmatpush1.msra.mxu0 0.0
    %249 = vmatprep.subr.mxu0 0.0
    %250 = vmatpush1.msra.mxu0 0.0
    %251 = vmatprep.subr.mxu0 0.0
    %252 = vmatpush1.msra.mxu0 0.0
    %253 = vmatprep.subr.mxu0 0.0
    %254 = vmatpush1.msra.mxu0 0.0
    %255 = vmatprep.subr.mxu0 0.0
    %256 = vmatpush1.msra.mxu0 0.0
    %257 = vmatprep.subr.mxu0 0.0
    %258 = vmatpush1.msra.mxu0 0.0
    %259 = vmatprep.subr.mxu0 0.0
    %260 = vmatpush1.msra.mxu0 0.0
    %261 = vmatprep.subr.mxu0 0.0
    %262 = vmatpush1.msra.mxu0 0.0
    %263 = vmatprep.subr.mxu0 0.0
    %264 = vmatpush1.msra.mxu0 0.0
    %265 = vmatprep.subr.mxu0 0.0
    %266 = vmatpush1.msra.mxu0 0.0
    %267 = vmatprep.subr.mxu0 0.0
    %268 = vmatpush1.msra.mxu0 0.0
    %269 = vmatprep.subr.mxu0 0.0
    %270 = vmatpush1.msra.mxu0 0.0
    %271 = vmatprep.subr.mxu0 0.0
    %272 = vmatpush1.msra.mxu0 0.0
    %273 = vmatprep.mubr.f32.mxu0 0.0
    %274 = vmatmul.mubr.f32.gmra.mrb[0].mxu0 %v208
    %v275 = vpop.f32.mrb[0].mxu0
    %v276 = vadd.f32 0.0, %v275
    %v277 = vpop.f32.mrb[0].mxu0
    %278 = vdwg.mxu0
    %279 = vmatprep.subr.mxu0 0.0
    %280 = vmatpush1.msra.mxu0 %v45
    %281 = vmatprep.subr.mxu0 0.0
    %282 = vmatpush1.msra.mxu0 %v46
    %283 = vmatprep.subr.mxu0 0.0
    %284 = vmatpush1.msra.mxu0 %v47
    %285 = vmatprep.subr.mxu0 0.0
    %286 = vmatpush1.msra.mxu0 %v48
    %287 = vmatprep.subr.mxu0 0.0
    %288 = vmatpush1.msra.mxu0 %v49
    %289 = vmatprep.subr.mxu0 0.0
    %290 = vmatpush1.msra.mxu0 %v50
    %291 = vmatprep.subr.mxu0 0.0
    %292 = vmatpush1.msra.mxu0 %v51
    %293 = vmatprep.subr.mxu0 0.0
    %294 = vmatpush1.msra.mxu0 %v52
    %295 = vmatprep.subr.mxu0 0.0
    %296 = vmatpush1.msra.mxu0 %v53
    %297 = vmatprep.subr.mxu0 0.0
    %298 = vmatpush1.msra.mxu0 %v54
    %299 = vmatprep.subr.mxu0 0.0
    %300 = vmatpush1.msra.mxu0 %v55
    %301 = vmatprep.subr.mxu0 0.0
    %302 = vmatpush1.msra.mxu0 %v56
    %303 = vmatprep.subr.mxu0 0.0
    %304 = vmatpush1.msra.mxu0 %v57
    %305 = vmatprep.subr.mxu0 0.0
    %306 = vmatpush1.msra.mxu0 %v58
    %307 = vmatprep.subr.mxu0 0.0
    %308 = vmatpush1.msra.mxu0 %v59
    %309 = vmatprep.subr.mxu0 0.0
    %310 = vmatpush1.msra.mxu0 %v60
    %311 = vmatprep.subr.mxu0 0.0
    %312 = vmatpush1.msra.mxu0 0.0
    %313 = vmatprep.subr.mxu0 0.0
    %314 = vmatpush1.msra.mxu0 0.0
    %315 = vmatprep.subr.mxu0 0.0
    %316 = vmatpush1.msra.mxu0 0.0
    %317 = vmatprep.subr.mxu0 0.0
    %318 = vmatpush1.msra.mxu0 0.0
    %319 = vmatprep.subr.mxu0 0.0
    %320 = vmatpush1.msra.mxu0 0.0
    %321 = vmatprep.subr.mxu0 0.0
    %322 = vmatpush1.msra.mxu0 0.0
    %323 = vmatprep.subr.mxu0 0.0
    %324 = vmatpush1.msra.mxu0 0.0
    %325 = vmatprep.subr.mxu0 0.0
    %326 = vmatpush1.msra.mxu0 0.0
    %327 = vmatprep.subr.mxu0 0.0
    %328 = vmatpush1.msra.mxu0 0.0
    %329 = vmatprep.subr.mxu0 0.0
    %330 = vmatpush1.msra.mxu0 0.0
    %331 = vmatprep.subr.mxu0 0.0
    %332 = vmatpush1.msra.mxu0 0.0
    %333 = vmatprep.subr.mxu0 0.0
    %334 = vmatpush1.msra.mxu0 0.0
    %335 = vmatprep.subr.mxu0 0.0
    %336 = vmatpush1.msra.mxu0 0.0
    %337 = vmatprep.subr.mxu0 0.0
    %338 = vmatpush1.msra.mxu0 0.0
    %339 = vmatprep.subr.mxu0 0.0
    %340 = vmatpush1.msra.mxu0 0.0
    %341 = vmatprep.subr.mxu0 0.0
    %342 = vmatpush1.msra.mxu0 0.0
    %343 = vmatprep.mubr.f32.mxu0 0.0
    %344 = vmatmul.mubr.f32.gmra.mrb[0].mxu0 %v207
    %v345 = vpop.f32.mrb[0].mxu0
    %v346 = vadd.f32 %v276, %v345
    %v347 = vpop.f32.mrb[0].mxu0
    %348 = vdwg.mxu0
    %v349 = vmul.f32 %v346, 0.03125
    %v350 = vmul.f32 %v204, %v204
    %v351 = vsub.f32 %v349, %v350
    %v352 = vmax.f32 %v351, 0.0
    %v353 = vadd.f32 %v352, 1e-05
    %v354 = vrsqrt.pop %v353
    %v355 = vsub.f32 %v44, %v204
    %v356 = vmul.f32 %v355, %v354
    %v357 = vld [vmem:[%s1] sm:$0x1]
    %v359 = vlaneseq
    %v360 = vshrl.u32 %v359, 7
    %v361 = vsub.s32 0, %v360
    %v362 = vrot.slane %v357, %v361
    %v364 = vmul.f32 %v356, %v362
    %v365 = vld [vmem:[%s2] sm:$0x1]
    %v367 = vlaneseq
    %v368 = vshrl.u32 %v367, 7
    %v369 = vsub.s32 0, %v368
    %v370 = vrot.slane %v365, %v369
    %v372 = vadd.f32 %v364, %v370
    %373 = vst [vmem:[#allocation7] sm:$0xf] %v372
    // Predicated region
    $region26: #{tpu_custom_call.1} parent=1 // pred_check
      _
    $region27: #{tpu_custom_call.1} parent=1 // pred_check_branch
      %375 = sbr.rel (0) target = $region29
    $region28: #{tpu_custom_call.1} parent=1 // pred_region
      %s377 = ssub.s32 64, 64
      %378 = vsyncadd [#allocation4], %s377
      %s380 = sshll.u32 [#allocation7], 4
      %s381 = int_to_ptr.vmem [resolvable:$true] %s380
      %383 = dma.vmem_to_hbm [thread:$0]  %s381, 64, %s4, [#allocation4]
    $region29: #{tpu_custom_call.1} parent=1 // pred_fallthru
      _
    // Predicated region
    $region30: #{tpu_custom_call.1} parent=1 // pred_check
      _
    $region31: #{tpu_custom_call.1} parent=1 // pred_check_branch
      %385 = sbr.rel (0) target = $region33
    $region32: #{tpu_custom_call.1} parent=1 // pred_region
      %386 = dma.done [#allocation4], 64
    $region33: #{tpu_custom_call.1} parent=1 // pred_fallthru
      _
    %387 = vsyncpa [#allocation3], 1
    %388 = vsyncpa [#allocation6], 1
    %389 = vsyncpa [#allocation4], 1

</llo_original>
